<compile_context>
chip_gen: v7x
topology: tpu7x:2x2x1
jax: 0.10.0
libtpu: 0.0.40
codegen_flags: <defaults>
</compile_context>

<pallas_src>
import functools

import jax
import jax.numpy as jnp
from jax.experimental import pallas as pl
from jax.experimental.pallas import tpu as pltpu


def _round_up(x: int, m: int) -> int:
    return ((x + m - 1) // m) * m


def _pad_feature_dims(in_N: int, out_N: int):
    """Lane-dense padding for the contraction (K) and output (N) dims."""
    in_N_p = _round_up(in_N, 128)
    if in_N_p > 2048:                 # K will be tiled -> make it divisible by 512
        in_N_p = _round_up(in_N, 512)
    out_N_p = _round_up(out_N, 128)
    return in_N_p, out_N_p


# ---------------------------------------------------------------------------
# Kernels
# ---------------------------------------------------------------------------
def unit_kernel_single_k(x_ref, w_ref, b_ref, o_ref):
    # x_ref: (tm, K)  activations          (bf16/compute dtype)
    # w_ref: (K, tn)  weight, [K, N] layout (bf16/compute dtype)
    # b_ref: (1, tn)  bias                  (f32)
    # o_ref: (tm, tn) output
    acc = jnp.dot(x_ref[...], w_ref[...], preferred_element_type=jnp.float32)
    o_ref[...] = jnp.tanh(acc + b_ref[...]).astype(o_ref.dtype)


def unit_kernel_multi_k(x_ref, w_ref, b_ref, o_ref, acc_ref):
    # Same as above but with a K grid axis and a resident f32 accumulator.
    k = pl.program_id(2)

    @pl.when(k == 0)
    def _init():
        acc_ref[...] = jnp.zeros_like(acc_ref)

    acc_ref[...] += jnp.dot(x_ref[...], w_ref[...],
                            preferred_element_type=jnp.float32)

    @pl.when(k == pl.num_programs(2) - 1)
    def _finalize():
        o_ref[...] = jnp.tanh(acc_ref[...] + b_ref[...]).astype(o_ref.dtype)


# ---------------------------------------------------------------------------
# Per-call forward (operates on pre-padded, pre-transposed parameters)
# ---------------------------------------------------------------------------
def _unit_forward_padded(x, w_kn, b_p, in_N, out_N, compute_dtype):
    B = x.shape[0]
    out_dtype = x.dtype
    in_N_p, out_N_p = w_kn.shape

    # Batch padding / M tile.
    if B <= 256:
        B_p = _round_up(B, 16)        # bf16 sublane packing (16 rows / packed tile)
        tm = B_p
    else:
        B_p = _round_up(B, 256)
        tm = 256

    # N tile: largest nice divisor of the padded out dim.
    tn = next(t for t in (1024, 512, 384, 256, 128)
              if t <= out_N_p and out_N_p % t == 0)

    # K tile: collapse the K axis whenever the whole padded in dim fits one block.
    if in_N_p <= 2048:
        tk = in_N_p
    else:
        tk = 512
    k_tiles = in_N_p // tk

    # Only x is padded/cast per call (weights/bias were prepared once in make_unit).
    x_p = jnp.pad(x.astype(compute_dtype),
                  ((0, B_p - B), (0, in_N_p - in_N)))

    # VMEM limit derived from the actual double-buffered tile footprint (+headroom).
    csize = jnp.dtype(compute_dtype).itemsize
    osize = jnp.dtype(out_dtype).itemsize
    footprint = 2 * (tm * tk * csize + tk * tn * csize + tn * 4 + tm * tn * osize)
    if k_tiles > 1:
        footprint += tm * tn * 4
    vmem_limit = min(max(int(footprint * 1.25) + (4 << 20), 16 << 20), 48 << 20)

    if k_tiles == 1:
        # Single-K fast path: no accumulator, no pl.when, direct output write.
        out_p = pl.pallas_call(
            unit_kernel_single_k,
            out_shape=jax.ShapeDtypeStruct((B_p, out_N_p), out_dtype),
            grid_spec=pltpu.PrefetchScalarGridSpec(
                num_scalar_prefetch=0,
                grid=(B_p // tm, out_N_p // tn),
                in_specs=[
                    pl.BlockSpec((tm, in_N_p), lambda i, j: (i, 0)),   # x
                    pl.BlockSpec((in_N_p, tn), lambda i, j: (0, j)),   # W [K, N]
                    pl.BlockSpec((1, tn), lambda i, j: (0, j)),        # bias
                ],
                out_specs=pl.BlockSpec((tm, tn), lambda i, j: (i, j)),
            ),
            compiler_params=pltpu.CompilerParams(
                dimension_semantics=("parallel", "parallel"),
                vmem_limit_bytes=vmem_limit,
            ),
        )(x_p, w_kn, b_p)
    else:
        # Large-K path: K innermost ("arbitrary"), f32 accumulator resident in VMEM.
        out_p = pl.pallas_call(
            unit_kernel_multi_k,
            out_shape=jax.ShapeDtypeStruct((B_p, out_N_p), out_dtype),
            grid_spec=pltpu.PrefetchScalarGridSpec(
                num_scalar_prefetch=0,
                grid=(B_p // tm, out_N_p // tn, k_tiles),
                in_specs=[
                    pl.BlockSpec((tm, tk), lambda i, j, k: (i, k)),    # x
                    pl.BlockSpec((tk, tn), lambda i, j, k: (k, j)),    # W [K, N]
                    pl.BlockSpec((1, tn), lambda i, j, k: (0, j)),     # bias
                ],
                out_specs=pl.BlockSpec((tm, tn), lambda i, j, k: (i, j)),
                scratch_shapes=[pltpu.VMEM((tm, tn), jnp.float32)],
            ),
            compiler_params=pltpu.CompilerParams(
                dimension_semantics=("parallel", "parallel", "arbitrary"),
                vmem_limit_bytes=vmem_limit,
            ),
        )(x_p, w_kn, b_p)

    return out_p[:B, :out_N]


# ---------------------------------------------------------------------------
# Parameter preparation (once per module, not per forward call)
# ---------------------------------------------------------------------------
def make_unit(weight, bias, compute_dtype=jnp.bfloat16):
    """Build the forward fn of `Unit` from nn.Linear params.

    weight: [out_N, in_N]  (PyTorch nn.Linear layout)
    bias:   [out_N]
    The weight is transposed/padded/cast here exactly once; only x is padded per call.
    """
    weight = jnp.asarray(weight)
    bias = jnp.asarray(bias)
    out_N, in_N = weight.shape
    in_N_p, out_N_p = _pad_feature_dims(in_N, out_N)

    # [K, N] layout for the MXU, padded lane-dense, cast to the compute dtype.
    w_kn = jnp.pad(weight.T.astype(compute_dtype),
                   ((0, in_N_p - in_N), (0, out_N_p - out_N)))
    b_p = jnp.pad(bias.astype(jnp.float32),
                  (0, out_N_p - out_N)).reshape(1, out_N_p)

    fwd = functools.partial(_unit_forward_padded, in_N=in_N, out_N=out_N,
                            compute_dtype=compute_dtype)
    return jax.jit(lambda x: fwd(x, w_kn, b_p))


if __name__ == "__main__":
    key = jax.random.PRNGKey(0)
    k_x, k_w, k_b, k_x2, k_w2, k_b2, k_x3, k_w3, k_b3 = jax.random.split(key, 9)

    # --- toy shape from the module: single-block fast path (grid = (1, 1)) ---
    batch, in_N, out_N = 8, 32, 64
    bound = 1.0 / (in_N ** 0.5)
    x = jax.random.normal(k_x, (batch, in_N), dtype=jnp.float32)
    weight = jax.random.uniform(k_w, (out_N, in_N), minval=-bound, maxval=bound,
                                dtype=jnp.float32)
    bias = jax.random.uniform(k_b, (out_N,), minval=-bound, maxval=bound,
                              dtype=jnp.float32)

    unit1 = make_unit(weight, bias)
    out = jax.block_until_ready(unit1(x))
    ref = jnp.tanh(x @ weight.T + bias)
    assert out.shape == (batch, out_N)
    assert jnp.allclose(out, ref, atol=3e-2, rtol=3e-2)   # bf16 compute tolerance

    # --- medium shape, still single-K, full-height M/N tiles ---
    B2, in2, out2 = 256, 256, 384
    bound2 = 1.0 / (in2 ** 0.5)
    x2 = jax.random.normal(k_x2, (B2, in2), dtype=jnp.float32)
    w2 = jax.random.uniform(k_w2, (out2, in2), minval=-bound2, maxval=bound2,
                            dtype=jnp.float32)
    b2 = jax.random.uniform(k_b2, (out2,), minval=-bound2, maxval=bound2,
                            dtype=jnp.float32)
    unit2 = make_unit(w2, b2)
    out2_k = jax.block_until_ready(unit2(x2))
    ref2 = jnp.tanh(x2 @ w2.T + b2)
    assert out2_k.shape == (B2, out2)
    assert jnp.allclose(out2_k, ref2, atol=3e-2, rtol=3e-2)

    # --- large-K shape exercising the tiled (M, N, K) accumulator path ---
    B3, in3, out3 = 384, 2304, 512
    bound3 = 1.0 / (in3 ** 0.5)
    x3 = jax.random.normal(k_x3, (B3, in3), dtype=jnp.float32)
    w3 = jax.random.uniform(k_w3, (out3, in3), minval=-bound3, maxval=bound3,
                            dtype=jnp.float32)
    b3 = jax.random.uniform(k_b3, (out3,), minval=-bound3, maxval=bound3,
                            dtype=jnp.float32)
    unit3 = make_unit(w3, b3)
    out3_k = jax.block_until_ready(unit3(x3))
    ref3 = jnp.tanh(x3 @ w3.T + b3)
    assert out3_k.shape == (B3, out3)
    assert jnp.allclose(out3_k, ref3, atol=3e-2, rtol=3e-2)

    print("KERNEL_OK")
</pallas_src>

<mosaic_0001>
module attributes {stable_mosaic.version = 11 : i64} {
  func.func @unit_kernel_single_k(%arg0: i32, %arg1: i32, %arg2: memref<16x128xbf16, #tpu.memory_space<vmem>>, %arg3: memref<128x128xbf16, #tpu.memory_space<vmem>>, %arg4: memref<1x128xf32, #tpu.memory_space<vmem>>, %arg5: memref<16x128xf32, #tpu.memory_space<vmem>>) attributes {dimension_semantics = [#tpu.dimension_semantics<parallel>, #tpu.dimension_semantics<parallel>], iteration_bounds = array<i64: 1, 1>, scalar_prefetch = 0 : i64, scratch_operands = 0 : i64, tpu.core_type = #tpu.core_type<tc>, window_params = [{transform_indices = @transform_0, window_bounds = array<i64: 16, 128>}, {transform_indices = @transform_1, window_bounds = array<i64: 128, 128>}, {transform_indices = @transform_2, window_bounds = array<i64: 1, 128>}, {transform_indices = @transform_3, window_bounds = array<i64: 16, 128>}]} {
    %c0 = arith.constant 0 : index
    %c0_0 = arith.constant 0 : index
    %0 = vector.load %arg2[%c0, %c0_0] : memref<16x128xbf16, #tpu.memory_space<vmem>>, vector<16x128xbf16>
    %c0_1 = arith.constant 0 : index
    %c0_2 = arith.constant 0 : index
    %1 = vector.load %arg3[%c0_1, %c0_2] : memref<128x128xbf16, #tpu.memory_space<vmem>>, vector<128x128xbf16>
    %cst = arith.constant dense<0.000000e+00> : vector<16x128xf32>
    %2 = tpu.matmul %0, %1, %cst {dimension_numbers = #tpu.dot_dimension_numbers<[1], [0], [0], [1], [0, 0, 1, 1], [], []>} : vector<16x128xbf16>, vector<128x128xbf16>, vector<16x128xf32> -> vector<16x128xf32>
    %c0_3 = arith.constant 0 : index
    %c0_4 = arith.constant 0 : index
    %3 = vector.load %arg4[%c0_3, %c0_4] : memref<1x128xf32, #tpu.memory_space<vmem>>, vector<1x128xf32>
    %4 = vector.broadcast %3 : vector<1x128xf32> to vector<16x128xf32>
    %5 = arith.addf %2, %4 : vector<16x128xf32>
    %6 = math.tanh %5 : vector<16x128xf32>
    %c0_5 = arith.constant 0 : index
    %c0_6 = arith.constant 0 : index
    %7 = vector.load %arg5[%c0_5, %c0_6] : memref<16x128xf32, #tpu.memory_space<vmem>>, vector<16x128xf32>
    tpu.vector_store %arg5[%c0_5, %c0_6], %6 {strides = array<i32>} : memref<16x128xf32, #tpu.memory_space<vmem>>, vector<16x128xf32>,
    return
  }
  func.func @transform_0(%arg0: i32, %arg1: i32) -> (i32, i32) {
    %c0_i32 = arith.constant 0 : i32
    %c0_i32_0 = arith.constant 0 : i32
    return %arg0, %c0_i32 : i32, i32
  }
  func.func @transform_1(%arg0: i32, %arg1: i32) -> (i32, i32) {
    %c0_i32 = arith.constant 0 : i32
    %c0_i32_0 = arith.constant 0 : i32
    return %c0_i32, %arg1 : i32, i32
  }
  func.func @transform_2(%arg0: i32, %arg1: i32) -> (i32, i32) {
    %c0_i32 = arith.constant 0 : i32
    %c0_i32_0 = arith.constant 0 : i32
    return %c0_i32, %arg1 : i32, i32
  }
  func.func @transform_3(%arg0: i32, %arg1: i32) -> (i32, i32) {
    %c0_i32 = arith.constant 0 : i32
    return %arg0, %arg1 : i32, i32
  }
}

</mosaic_0001>

<llo_original>
// kernel: _lambda_.1
$region0: #{_lambda_.1}
  #allocation0 [shape = 'u32[]', space=smem, size = 0x4, offset = 0x4, fixed_abs, tag = 'smem constant byte address 0x4 - core index']
  #allocation1 [shape = 'u32[144,128]{1,0:T(1,128)}', space=vmem, size = 0x12000, scoped, tag = 'internal scratch']
  %s0 = inlined_call_operand.vmem [shape: bf16[16,128], index: 0, kind: input, shape index: {}]
  %s1 = inlined_call_operand.hbm [shape: bf16[128,128], index: 1, kind: input, shape index: {}]
  %s2 = inlined_call_operand.vmem [shape: f32[1,128], index: 2, kind: input, shape index: {}]
  %s3 = inlined_call_operand.vmem [shape: f32[16,128], index: 3, kind: output, shape index: {}]
  %s4 = sld [smem:[#allocation0]]
  $region26: #{_lambda_.1} parent=0
    _
  %s6 = ssub.s32 1, %s4
  %s7 = scalar_select 0, %s6, %s4
  $region1: #{_lambda_.1} parent=0
    #allocation2 [shape = 'u8[32768]{0}', space=vmem, size = 0x8000, scoped, tag = 'input window, operand 1, single buffered']
    #allocation3 [shape = 's32[1]{0}', space=sflag, size = 0x4, scoped, tag = 'scoped memory for _lambda_.1']
    %8 = vsyncpa [#allocation3], 0
    // Predicated region
    $region2: #{_lambda_.1} parent=1 // pred_check
      _
    $region3: #{_lambda_.1} parent=1 // pred_check_branch
      %10 = sbr.rel (0) target = $region5
    $region4: #{_lambda_.1} parent=1 // pred_region
      _
    $region5: #{_lambda_.1} parent=1 // pred_fallthru
      _
    // Predicated region
    $region6: #{_lambda_.1} parent=1 // pred_check
      _
    $region7: #{_lambda_.1} parent=1 // pred_check_branch
      %12 = sbr.rel (0) target = $region9
    $region8: #{_lambda_.1} parent=1 // pred_region
      %s14 = ssub.s32 1024, 1024
      %15 = vsyncadd [#allocation3], %s14
      %s16 = sshll.u32 [#allocation2], 4
      %s17 = int_to_ptr.vmem [resolvable:$true] %s16
      %22 = dma.hbm_to_vmem [thread:$0]  %s1, 1024, %s17, [#allocation3], 64, 64, 4
    $region9: #{_lambda_.1} parent=1 // pred_fallthru
      _
    // Predicated region
    $region10: #{_lambda_.1} parent=1 // pred_check
      _
    $region11: #{_lambda_.1} parent=1 // pred_check_branch
      %24 = sbr.rel (0) target = $region13
    $region12: #{_lambda_.1} parent=1 // pred_region
      _
    $region13: #{_lambda_.1} parent=1 // pred_fallthru
      _
    // Predicated region
    $region14: #{_lambda_.1} parent=1 // pred_check
      _
    $region15: #{_lambda_.1} parent=1 // pred_check_branch
      %26 = sbr.rel (0) target = $region17
    $region16: #{_lambda_.1} parent=1 // pred_region
      %27 = dma.done [#allocation3], 1024
    $region17: #{_lambda_.1} parent=1 // pred_fallthru
      _
    %v29 = vld [vmem:[%s0] sm:$0xf]
    %v30 = vld [vmem:[%s0 + $0x4] sm:$0xf]
    %v31 = vld [vmem:[#allocation2] sm:$0xf]
    %v32 = vld [vmem:[#allocation2 + $0x4] sm:$0xf]
    %v33 = vld [vmem:[#allocation2 + $0x8] sm:$0xf]
    %v34 = vld [vmem:[#allocation2 + $0xc] sm:$0xf]
    %v35 = vld [vmem:[#allocation2 + $0x10] sm:$0xf]
    %v36 = vld [vmem:[#allocation2 + $0x14] sm:$0xf]
    %v37 = vld [vmem:[#allocation2 + $0x18] sm:$0xf]
    %v38 = vld [vmem:[#allocation2 + $0x1c] sm:$0xf]
    %v39 = vld [vmem:[#allocation2 + $0x20] sm:$0xf]
    %v40 = vld [vmem:[#allocation2 + $0x24] sm:$0xf]
    %v41 = vld [vmem:[#allocation2 + $0x28] sm:$0xf]
    %v42 = vld [vmem:[#allocation2 + $0x2c] sm:$0xf]
    %v43 = vld [vmem:[#allocation2 + $0x30] sm:$0xf]
    %v44 = vld [vmem:[#allocation2 + $0x34] sm:$0xf]
    %v45 = vld [vmem:[#allocation2 + $0x38] sm:$0xf]
    %v46 = vld [vmem:[#allocation2 + $0x3c] sm:$0xf]
    %v47 = vld [vmem:[%s2] sm:$0x1]
    %v49 = vlaneseq
    %v50 = vshrl.u32 %v49, 7
    %v51 = vsub.s32 0, %v50
    %v52 = vrot.slane %v47, %v51
    %v56 = vunpack.c.l.b16 %v29
    %v57 = vunpack.c.l.b16 %v30
    %v58 = vpack.c.b16 %v57, %v56
    %v76 = vunpack.c.l.b16 %v31
    %v77 = vunpack.c.l.b16 %v32
    %v78 = vunpack.c.l.b16 %v33
    %v79 = vunpack.c.l.b16 %v34
    %v80 = vunpack.c.l.b16 %v35
    %v81 = vunpack.c.l.b16 %v36
    %v82 = vunpack.c.l.b16 %v37
    %v83 = vunpack.c.l.b16 %v38
    %v84 = vunpack.c.l.b16 %v39
    %v85 = vunpack.c.l.b16 %v40
    %v86 = vunpack.c.l.b16 %v41
    %v87 = vunpack.c.l.b16 %v42
    %v88 = vunpack.c.l.b16 %v43
    %v89 = vunpack.c.l.b16 %v44
    %v90 = vunpack.c.l.b16 %v45
    %v91 = vunpack.c.l.b16 %v46
    %v92 = vpack.c.b16 %v77, %v76
    %v93 = vpack.c.b16 %v79, %v78
    %v94 = vpack.c.b16 %v81, %v80
    %v95 = vpack.c.b16 %v83, %v82
    %v96 = vpack.c.b16 %v85, %v84
    %v97 = vpack.c.b16 %v87, %v86
    %v98 = vpack.c.b16 %v89, %v88
    %v99 = vpack.c.b16 %v91, %v90
    %108 = vmatprep.subr.bf16.mxu0 0
    %109 = vmatpush1.bf16.msra.mxu0 %v92
    %110 = vmatprep.subr.bf16.mxu0 0
    %111 = vmatpush1.bf16.msra.mxu0 %v93
    %112 = vmatprep.subr.bf16.mxu0 0
    %113 = vmatpush1.bf16.msra.mxu0 %v94
    %114 = vmatprep.subr.bf16.mxu0 0
    %115 = vmatpush1.bf16.msra.mxu0 %v95
    %116 = vmatprep.subr.bf16.mxu0 0
    %117 = vmatpush1.bf16.msra.mxu0 %v96
    %118 = vmatprep.subr.bf16.mxu0 0
    %119 = vmatpush1.bf16.msra.mxu0 %v97
    %120 = vmatprep.subr.bf16.mxu0 0
    %121 = vmatpush1.bf16.msra.mxu0 %v98
    %122 = vmatprep.subr.bf16.mxu0 0
    %123 = vmatpush1.bf16.msra.mxu0 %v99
    %124 = vmatprep.subr.bf16.mxu0 0
    %125 = vmatpush1.bf16.msra.mxu0 0
    %126 = vmatprep.subr.bf16.mxu0 0
    %127 = vmatpush1.bf16.msra.mxu0 0
    %128 = vmatprep.subr.bf16.mxu0 0
    %129 = vmatpush1.bf16.msra.mxu0 0
    %130 = vmatprep.subr.bf16.mxu0 0
    %131 = vmatpush1.bf16.msra.mxu0 0
    %132 = vmatprep.subr.bf16.mxu0 0
    %133 = vmatpush1.bf16.msra.mxu0 0
    %134 = vmatprep.subr.bf16.mxu0 0
    %135 = vmatpush1.bf16.msra.mxu0 0
    %136 = vmatprep.subr.bf16.mxu0 0
    %137 = vmatpush1.bf16.msra.mxu0 0
    %138 = vmatprep.subr.bf16.mxu0 0
    %139 = vmatpush1.bf16.msra.mxu0 0
    %140 = vmatprep.mubr.bf16.mxu0 0
    %141 = vmatmul.mubr.bf16.gmra.mrb[0].mxu0 %v58
    %v142 = vpop.f32.mrb[0].mxu0
    %v143 = vadd.f32 %v52, %v142
    %v144 = vpop.f32.mrb[0].mxu0
    %v145 = vpop.f32.mrb[0].mxu0
    %v146 = vadd.f32 %v52, %v145
    %v147 = vpop.f32.mrb[0].mxu0
    %148 = vdwg.mxu0
    %v149 = vtanh.pop %v143
    %v150 = vtanh.pop %v146
    %151 = vst [vmem:[%s3] sm:$0xff] %v149
    %152 = vst [vmem:[%s3 + $0x8] sm:$0xff] %v150
    // Predicated region
    $region18: #{_lambda_.1} parent=1 // pred_check
      _
    $region19: #{_lambda_.1} parent=1 // pred_check_branch
      %154 = sbr.rel (0) target = $region21
    $region20: #{_lambda_.1} parent=1 // pred_region
      _
    $region21: #{_lambda_.1} parent=1 // pred_fallthru
      _
    // Predicated region
    $region22: #{_lambda_.1} parent=1 // pred_check
      _
    $region23: #{_lambda_.1} parent=1 // pred_check_branch
      %156 = sbr.rel (0) target = $region25
    $region24: #{_lambda_.1} parent=1 // pred_region
      _
    $region25: #{_lambda_.1} parent=1 // pred_fallthru
      _
    %157 = vsyncpa [#allocation3], 1

</llo_original>
